<compile_context>
chip_gen: v6e
topology: v6e:2x2x1
jax: 0.10.0
libtpu: 0.0.40
codegen_flags: <defaults>
</compile_context>

<pallas_src>
from functools import partial

import jax
import jax.numpy as jnp
from jax.experimental import pallas as pl
from jax.experimental.pallas import tpu as pltpu

LEAKY_SLOPE = 0.01   # torch.nn.LeakyReLU() default negative_slope
SN_EPS = 1e-5        # SwitchNorm2d default eps


def _vmem_limit_bytes():
    """~75% of this generation's physical VMEM (96 MiB v5e/v6e, 48 MiB v7x)."""
    try:
        cap = int(pltpu.get_tpu_info().vmem_capacity_bytes)
    except Exception:
        cap = 64 * 1024 * 1024
    return max(32 * 1024 * 1024, min(cap * 3 // 4, 100 * 1024 * 1024))


def _pick_tile(m, candidates):
    """Largest lane tile (multiple of 128) dividing m; full extent fallback."""
    for t in candidates:
        if m % t == 0:
            return t
    return m


# --------------------------------------------------------------------------- #
# Pass 1: conv as ONE K-folded bf16 MXU matmul + bias + LeakyReLU + tile stats #
# --------------------------------------------------------------------------- #
def _conv_leaky_stats_kernel(x_ref, w_ref, b_ref, y_ref, sum_ref, ssq_ref):
    # x_ref: (1, K, TM) bf16  im2col slab for this (batch, spatial tile)
    # w_ref: (Cout, K)  bf16  with K = KH*KW*Cin folded into the contraction
    # b_ref: (Cout, 1)  f32
    y = jnp.dot(w_ref[...], x_ref[0], preferred_element_type=jnp.float32)
    y = y + b_ref[...]
    y = jnp.where(y >= 0, y, jnp.float32(LEAKY_SLOPE) * y)
    y_ref[0] = y
    # per-(batch, tile) partial statistics; finalized once in the JAX glue
    sum_ref[0, 0] = jnp.sum(y, axis=-1, keepdims=True)        # (Cout, 1)
    ssq_ref[0, 0] = jnp.sum(y * y, axis=-1, keepdims=True)    # (Cout, 1)


# --------------------------------------------------------------------------- #
# Pass 2: SwitchNorm apply — pure per-(n, c) FMA over the lane-dense buffer    #
# --------------------------------------------------------------------------- #
def _scale_shift_kernel(y_ref, scale_ref, shift_ref, o_ref):
    o_ref[0] = y_ref[0] * scale_ref[0] + shift_ref[0]


@partial(jax.jit, static_argnames=("stride", "padding"))
def conv_block_forward(x, params, *, stride=1, padding=1):
    """x: (N, Cin, H, W) float32 (PyTorch NCHW). Returns (N, Cout, OH, OW)."""
    assert stride == 1, "Pallas path implemented for stride=1"
    # TODO(synk): stride > 1 needs a strided im2col gather.

    w = params["conv_w"].astype(jnp.float32)        # (Cout, Cin, KH, KW)
    b = params["conv_b"].astype(jnp.float32)        # (Cout,)
    gamma = params["sn_gamma"].astype(jnp.float32)  # (Cout,)
    beta = params["sn_beta"].astype(jnp.float32)    # (Cout,)
    mean_w = params["sn_mean_w"].astype(jnp.float32)
    var_w = params["sn_var_w"].astype(jnp.float32)

    n, cin, h, wdt = x.shape
    cout, _, kh, kw = w.shape
    oh = (h + 2 * padding - kh) // stride + 1
    ow = (wdt + 2 * padding - kw) // stride + 1
    m = oh * ow
    kcol = kh * kw * cin

    # ---- bf16 im2col slab: xcol[n, (dy*KW+dx)*Cin+ci, oy*OW+ox] -------------
    xpad = jnp.pad(x.astype(jnp.bfloat16),
                   ((0, 0), (0, 0), (padding, padding), (padding, padding)))
    taps = [xpad[:, :, dy:dy + oh, dx:dx + ow]
            for dy in range(kh) for dx in range(kw)]
    xcol = jnp.stack(taps, axis=1).reshape(n, kcol, m)

    # weights folded to (Cout, KH*KW*Cin), matching xcol's (dy, dx, ci) order
    wflat = jnp.transpose(w, (0, 2, 3, 1)).reshape(cout, kcol).astype(jnp.bfloat16)
    b2 = b.reshape(cout, 1)

    vmem_limit = _vmem_limit_bytes()

    # ---- pass 1: conv + bias + LeakyReLU + per-tile partial stats -----------
    tm1 = _pick_tile(m, (2048, 1024, 512, 256, 128))
    nt1 = m // tm1
    y, psum, pssq = pl.pallas_call(
        _conv_leaky_stats_kernel,
        grid=(n, nt1),
        in_specs=[
            pl.BlockSpec((1, kcol, tm1), lambda i, j: (i, 0, j)),
            pl.BlockSpec((cout, kcol), lambda i, j: (0, 0)),
            pl.BlockSpec((cout, 1), lambda i, j: (0, 0)),
        ],
        out_specs=[
            pl.BlockSpec((1, cout, tm1), lambda i, j: (i, 0, j)),
            pl.BlockSpec((1, 1, cout, 1), lambda i, j: (i, j, 0, 0)),
            pl.BlockSpec((1, 1, cout, 1), lambda i, j: (i, j, 0, 0)),
        ],
        out_shape=[
            jax.ShapeDtypeStruct((n, cout, m), jnp.float32),
            jax.ShapeDtypeStruct((n, nt1, cout, 1), jnp.float32),
            jax.ShapeDtypeStruct((n, nt1, cout, 1), jnp.float32),
        ],
        compiler_params=pltpu.CompilerParams(
            dimension_semantics=("parallel", "parallel"),
            vmem_limit_bytes=vmem_limit),
    )(xcol, wflat, b2)

    # ---- SwitchNorm statistics: tiny (N, C) work, done ONCE in JAX glue -----
    sums = jnp.sum(psum, axis=1)                       # (N, C, 1)
    ssqs = jnp.sum(pssq, axis=1)                       # (N, C, 1)
    mean_in = sums / m
    denom = max(m - 1, 1)                              # torch .var() unbiased; guard m==1
    var_in = (ssqs - m * mean_in * mean_in) / denom
    temp = var_in + mean_in * mean_in
    mean_ln = jnp.mean(mean_in, axis=1, keepdims=True)
    var_ln = jnp.mean(temp, axis=1, keepdims=True) - mean_ln * mean_ln
    mean_bn = jnp.mean(mean_in, axis=0, keepdims=True)
    var_bn = jnp.mean(temp, axis=0, keepdims=True) - mean_bn * mean_bn
    mw = jax.nn.softmax(mean_w)
    vw = jax.nn.softmax(var_w)
    mean = mw[0] * mean_in + mw[1] * mean_ln + mw[2] * mean_bn
    var = vw[0] * var_in + vw[1] * var_ln + vw[2] * var_bn
    var = jnp.maximum(var, 0.0)                        # guard cancellation negatives
    scale = gamma.reshape(1, cout, 1) * jax.lax.rsqrt(var + SN_EPS)   # (N, C, 1)
    shift = beta.reshape(1, cout, 1) - mean * scale                   # (N, C, 1)

    # ---- pass 2: o = y*scale + shift, in place over the pass-1 buffer -------
    # NOTE: input_output_aliases={0:0} is only valid while the y input and the
    # output keep identical block shapes / index maps (read-then-write per tile).
    tm2 = _pick_tile(m, (8192, 4096, 2048, 1024, 512, 256, 128))
    nt2 = m // tm2
    out = pl.pallas_call(
        _scale_shift_kernel,
        grid=(n, nt2),
        in_specs=[
            pl.BlockSpec((1, cout, tm2), lambda i, j: (i, 0, j)),
            pl.BlockSpec((1, cout, 1), lambda i, j: (i, 0, 0)),
            pl.BlockSpec((1, cout, 1), lambda i, j: (i, 0, 0)),
        ],
        out_specs=pl.BlockSpec((1, cout, tm2), lambda i, j: (i, 0, j)),
        out_shape=jax.ShapeDtypeStruct((n, cout, m), jnp.float32),
        input_output_aliases={0: 0},
        compiler_params=pltpu.CompilerParams(
            dimension_semantics=("parallel", "parallel"),
            vmem_limit_bytes=vmem_limit),
    )(y, scale, shift)

    # (N, Cout, OH*OW) -> NCHW is a free metadata reshape (no transpose/copy).
    return out.reshape(n, cout, oh, ow)


# --------------------------------------------------------------------------- #
# Pure-JAX f32 reference: Conv2d -> LeakyReLU -> SwitchNorm2d (training mode) #
# --------------------------------------------------------------------------- #
def _reference(x, params, *, stride=1, padding=1):
    w, b = params["conv_w"], params["conv_b"]
    gamma, beta = params["sn_gamma"], params["sn_beta"]
    mean_w, var_w = params["sn_mean_w"], params["sn_var_w"]

    y = jax.lax.conv_general_dilated(
        x, w, (stride, stride), [(padding, padding), (padding, padding)],
        dimension_numbers=("NCHW", "OIHW", "NCHW"))
    y = y + b[None, :, None, None]
    y = jnp.where(y >= 0, y, LEAKY_SLOPE * y)

    n, c, hh, ww = y.shape
    yf = y.reshape(n, c, hh * ww)
    mean_in = yf.mean(-1, keepdims=True)
    var_in = jnp.var(yf, axis=-1, keepdims=True, ddof=1)
    temp = var_in + mean_in ** 2
    mean_ln = mean_in.mean(1, keepdims=True)
    var_ln = temp.mean(1, keepdims=True) - mean_ln ** 2
    mean_bn = mean_in.mean(0, keepdims=True)
    var_bn = temp.mean(0, keepdims=True) - mean_bn ** 2
    mw = jax.nn.softmax(mean_w)
    vw = jax.nn.softmax(var_w)
    mean = mw[0] * mean_in + mw[1] * mean_ln + mw[2] * mean_bn
    var = vw[0] * var_in + vw[1] * var_ln + vw[2] * var_bn
    yn = (yf - mean) / jnp.sqrt(var + SN_EPS)
    yn = yn.reshape(n, c, hh, ww)
    return yn * gamma[None, :, None, None] + beta[None, :, None, None]


if __name__ == "__main__":
    # Small shapes consistent with the module: N=2, Cin=4, H=W=16, Cout=8, k=3.
    N, CIN, H, W = 2, 4, 16, 16
    COUT, KS, STRIDE, PAD = 8, 3, 1, 1

    key = jax.random.PRNGKey(0)
    k_x, k_w, k_b = jax.random.split(key, 3)
    x = jax.random.normal(k_x, (N, CIN, H, W), dtype=jnp.float32)

    params = {
        "conv_w": 0.1 * jax.random.normal(k_w, (COUT, CIN, KS, KS), dtype=jnp.float32),
        "conv_b": 0.1 * jax.random.normal(k_b, (COUT,), dtype=jnp.float32),
        "sn_gamma": jnp.ones((COUT,), jnp.float32),    # SwitchNorm2d weight init
        "sn_beta": jnp.zeros((COUT,), jnp.float32),    # SwitchNorm2d bias init
        "sn_mean_w": jnp.ones((3,), jnp.float32),      # mean_weight init
        "sn_var_w": jnp.ones((3,), jnp.float32),       # var_weight init
    }
    # TODO(synk): SwitchNorm2d running_mean/running_var moving-average buffer
    # updates (eval-mode path) are stateful and not reproduced; training-mode
    # batch statistics are implemented instead.

    out = conv_block_forward(x, params, stride=STRIDE, padding=PAD)
    out = jax.block_until_ready(out)

    ref = _reference(x, params, stride=STRIDE, padding=PAD)
    assert out.shape == ref.shape == (N, COUT, H, W)
    max_err = jnp.max(jnp.abs(out - ref))
    # bf16 MXU operands (per perf review) vs f32 reference -> bf16 tolerance.
    assert jnp.allclose(out, ref, rtol=2e-2, atol=2e-2), f"max abs err = {max_err}"

    print("KERNEL_OK")
</pallas_src>

<mosaic_0001>
module attributes {stable_mosaic.version = 11 : i64} {
  func.func @_conv_leaky_stats_kernel(%arg0: i32, %arg1: i32, %arg2: memref<1x36x256xbf16, #tpu.memory_space<vmem>>, %arg3: memref<8x36xbf16, #tpu.memory_space<vmem>>, %arg4: memref<8x1xf32, #tpu.memory_space<vmem>>, %arg5: memref<1x8x256xf32, #tpu.memory_space<vmem>>, %arg6: memref<1x1x8x1xf32, #tpu.memory_space<vmem>>, %arg7: memref<1x1x8x1xf32, #tpu.memory_space<vmem>>) attributes {dimension_semantics = [#tpu.dimension_semantics<parallel>, #tpu.dimension_semantics<parallel>], iteration_bounds = array<i64: 2, 1>, scalar_prefetch = 0 : i64, scratch_operands = 0 : i64, tpu.core_type = #tpu.core_type<tc>, window_params = [{transform_indices = @transform_0, window_bounds = array<i64: 1, 36, 256>}, {pipeline_mode = #tpu.pipeline_mode<synchronous>, transform_indices = @transform_1, window_bounds = array<i64: 8, 36>}, {pipeline_mode = #tpu.pipeline_mode<synchronous>, transform_indices = @transform_2, window_bounds = array<i64: 8, 1>}, {transform_indices = @transform_3, window_bounds = array<i64: 1, 8, 256>}, {transform_indices = @transform_4, window_bounds = array<i64: 1, 1, 8, 1>}, {transform_indices = @transform_5, window_bounds = array<i64: 1, 1, 8, 1>}]} {
    %c0 = arith.constant 0 : index
    %c0_0 = arith.constant 0 : index
    %0 = vector.load %arg3[%c0, %c0_0] : memref<8x36xbf16, #tpu.memory_space<vmem>>, vector<8x36xbf16>
    %c0_1 = arith.constant 0 : index
    %c0_2 = arith.constant 0 : index
    %c0_3 = arith.constant 0 : index
    %1 = vector.load %arg2[%c0_1, %c0_2, %c0_3] : memref<1x36x256xbf16, #tpu.memory_space<vmem>>, vector<1x36x256xbf16>
    %2 = vector.shape_cast %1 : vector<1x36x256xbf16> to vector<36x256xbf16>
    %cst = arith.constant dense<0.000000e+00> : vector<8x256xf32>
    %3 = tpu.matmul %0, %2, %cst {dimension_numbers = #tpu.dot_dimension_numbers<[1], [0], [0], [1], [0, 0, 1, 1], [], []>} : vector<8x36xbf16>, vector<36x256xbf16>, vector<8x256xf32> -> vector<8x256xf32>
    %c0_4 = arith.constant 0 : index
    %c0_5 = arith.constant 0 : index
    %4 = vector.load %arg4[%c0_4, %c0_5] : memref<8x1xf32, #tpu.memory_space<vmem>>, vector<8x1xf32>
    %5 = vector.broadcast %4 : vector<8x1xf32> to vector<8x256xf32>
    %6 = arith.addf %3, %5 : vector<8x256xf32>
    %cst_6 = arith.constant 0.000000e+00 : f32
    %7 = vector.broadcast %cst_6 : f32 to vector<8x256xf32>
    %8 = arith.cmpf oge, %6, %7 : vector<8x256xf32>
    %cst_7 = arith.constant 0.00999999977 : f32
    %9 = vector.broadcast %cst_7 : f32 to vector<8x256xf32>
    %10 = arith.mulf %9, %6 : vector<8x256xf32>
    %11 = arith.select %8, %6, %10 : vector<8x256xi1>, vector<8x256xf32>
    %c0_8 = arith.constant 0 : index
    %c0_9 = arith.constant 0 : index
    %c0_10 = arith.constant 0 : index
    %12 = vector.load %arg5[%c0_8, %c0_9, %c0_10] : memref<1x8x256xf32, #tpu.memory_space<vmem>>, vector<1x8x256xf32>
    %13 = vector.shape_cast %12 : vector<1x8x256xf32> to vector<8x256xf32>
    %14 = vector.shape_cast %11 : vector<8x256xf32> to vector<1x8x256xf32>
    tpu.vector_store %arg5[%c0_8, %c0_9, %c0_10], %14 {strides = array<i32>} : memref<1x8x256xf32, #tpu.memory_space<vmem>>, vector<1x8x256xf32>,
    %cst_11 = arith.constant dense<0.000000e+00> : vector<8xf32>
    %15 = vector.multi_reduction <add>, %11, %cst_11 [1] : vector<8x256xf32> to vector<8xf32>
    %16 = vector.shape_cast %15 : vector<8xf32> to vector<8x1xf32>
    %c0_12 = arith.constant 0 : index
    %c0_13 = arith.constant 0 : index
    %c0_14 = arith.constant 0 : index
    %c0_15 = arith.constant 0 : index
    %17 = vector.load %arg6[%c0_12, %c0_13, %c0_14, %c0_15] : memref<1x1x8x1xf32, #tpu.memory_space<vmem>>, vector<1x1x8x1xf32>
    %18 = vector.shape_cast %17 : vector<1x1x8x1xf32> to vector<8x1xf32>
    %19 = vector.shape_cast %16 : vector<8x1xf32> to vector<1x1x8x1xf32>
    tpu.vector_store %arg6[%c0_12, %c0_13, %c0_14, %c0_15], %19 {strides = array<i32>} : memref<1x1x8x1xf32, #tpu.memory_space<vmem>>, vector<1x1x8x1xf32>,
    %20 = arith.mulf %11, %11 : vector<8x256xf32>
    %cst_16 = arith.constant dense<0.000000e+00> : vector<8xf32>
    %21 = vector.multi_reduction <add>, %20, %cst_16 [1] : vector<8x256xf32> to vector<8xf32>
    %22 = vector.shape_cast %21 : vector<8xf32> to vector<8x1xf32>
    %c0_17 = arith.constant 0 : index
    %c0_18 = arith.constant 0 : index
    %c0_19 = arith.constant 0 : index
    %c0_20 = arith.constant 0 : index
    %23 = vector.load %arg7[%c0_17, %c0_18, %c0_19, %c0_20] : memref<1x1x8x1xf32, #tpu.memory_space<vmem>>, vector<1x1x8x1xf32>
    %24 = vector.shape_cast %23 : vector<1x1x8x1xf32> to vector<8x1xf32>
    %25 = vector.shape_cast %22 : vector<8x1xf32> to vector<1x1x8x1xf32>
    tpu.vector_store %arg7[%c0_17, %c0_18, %c0_19, %c0_20], %25 {strides = array<i32>} : memref<1x1x8x1xf32, #tpu.memory_space<vmem>>, vector<1x1x8x1xf32>,
    return
  }
  func.func @transform_0(%arg0: i32, %arg1: i32) -> (i32, i32, i32) {
    %c0_i32 = arith.constant 0 : i32
    %c0_i32_0 = arith.constant 0 : i32
    return %arg0, %c0_i32, %arg1 : i32, i32, i32
  }
  func.func @transform_1(%arg0: i32, %arg1: i32) -> (i32, i32) {
    %c0_i32 = arith.constant 0 : i32
    %c0_i32_0 = arith.constant 0 : i32
    %c0_i32_1 = arith.constant 0 : i32
    return %c0_i32, %c0_i32_0 : i32, i32
  }
  func.func @transform_2(%arg0: i32, %arg1: i32) -> (i32, i32) {
    %c0_i32 = arith.constant 0 : i32
    %c0_i32_0 = arith.constant 0 : i32
    %c0_i32_1 = arith.constant 0 : i32
    return %c0_i32, %c0_i32_0 : i32, i32
  }
  func.func @transform_3(%arg0: i32, %arg1: i32) -> (i32, i32, i32) {
    %c0_i32 = arith.constant 0 : i32
    %c0_i32_0 = arith.constant 0 : i32
    return %arg0, %c0_i32, %arg1 : i32, i32, i32
  }
  func.func @transform_4(%arg0: i32, %arg1: i32) -> (i32, i32, i32, i32) {
    %c0_i32 = arith.constant 0 : i32
    %c0_i32_0 = arith.constant 0 : i32
    %c0_i32_1 = arith.constant 0 : i32
    return %arg0, %arg1, %c0_i32, %c0_i32_0 : i32, i32, i32, i32
  }
  func.func @transform_5(%arg0: i32, %arg1: i32) -> (i32, i32, i32, i32) {
    %c0_i32 = arith.constant 0 : i32
    %c0_i32_0 = arith.constant 0 : i32
    %c0_i32_1 = arith.constant 0 : i32
    return %arg0, %arg1, %c0_i32, %c0_i32_0 : i32, i32, i32, i32
  }
}

module attributes {stable_mosaic.version = 11 : i64} {
  func.func @_scale_shift_kernel(%arg0: i32, %arg1: i32, %arg2: memref<1x8x256xf32, #tpu.memory_space<vmem>>, %arg3: memref<1x8x1xf32, #tpu.memory_space<vmem>>, %arg4: memref<1x8x1xf32, #tpu.memory_space<vmem>>, %arg5: memref<1x8x256xf32, #tpu.memory_space<vmem>>) attributes {dimension_semantics = [#tpu.dimension_semantics<parallel>, #tpu.dimension_semantics<parallel>], iteration_bounds = array<i64: 2, 1>, scalar_prefetch = 0 : i64, scratch_operands = 0 : i64, tpu.core_type = #tpu.core_type<tc>, window_params = [{transform_indices = @transform_0, window_bounds = array<i64: 1, 8, 256>}, {transform_indices = @transform_1, window_bounds = array<i64: 1, 8, 1>}, {transform_indices = @transform_2, window_bounds = array<i64: 1, 8, 1>}, {transform_indices = @transform_3, window_bounds = array<i64: 1, 8, 256>}]} {
    %c0 = arith.constant 0 : index
    %c0_0 = arith.constant 0 : index
    %c0_1 = arith.constant 0 : index
    %0 = vector.load %arg2[%c0, %c0_0, %c0_1] : memref<1x8x256xf32, #tpu.memory_space<vmem>>, vector<1x8x256xf32>
    %1 = vector.shape_cast %0 : vector<1x8x256xf32> to vector<8x256xf32>
    %c0_2 = arith.constant 0 : index
    %c0_3 = arith.constant 0 : index
    %c0_4 = arith.constant 0 : index
    %2 = vector.load %arg3[%c0_2, %c0_3, %c0_4] : memref<1x8x1xf32, #tpu.memory_space<vmem>>, vector<1x8x1xf32>
    %3 = vector.shape_cast %2 : vector<1x8x1xf32> to vector<8x1xf32>
    %4 = vector.broadcast %3 : vector<8x1xf32> to vector<8x256xf32>
    %5 = arith.mulf %1, %4 : vector<8x256xf32>
    %c0_5 = arith.constant 0 : index
    %c0_6 = arith.constant 0 : index
    %c0_7 = arith.constant 0 : index
    %6 = vector.load %arg4[%c0_5, %c0_6, %c0_7] : memref<1x8x1xf32, #tpu.memory_space<vmem>>, vector<1x8x1xf32>
    %7 = vector.shape_cast %6 : vector<1x8x1xf32> to vector<8x1xf32>
    %8 = vector.broadcast %7 : vector<8x1xf32> to vector<8x256xf32>
    %9 = arith.addf %5, %8 : vector<8x256xf32>
    %c0_8 = arith.constant 0 : index
    %c0_9 = arith.constant 0 : index
    %c0_10 = arith.constant 0 : index
    %10 = vector.load %arg5[%c0_8, %c0_9, %c0_10] : memref<1x8x256xf32, #tpu.memory_space<vmem>>, vector<1x8x256xf32>
    %11 = vector.shape_cast %10 : vector<1x8x256xf32> to vector<8x256xf32>
    %12 = vector.shape_cast %9 : vector<8x256xf32> to vector<1x8x256xf32>
    tpu.vector_store %arg5[%c0_8, %c0_9, %c0_10], %12 {strides = array<i32>} : memref<1x8x256xf32, #tpu.memory_space<vmem>>, vector<1x8x256xf32>,
    return
  }
  func.func @transform_0(%arg0: i32, %arg1: i32) -> (i32, i32, i32) {
    %c0_i32 = arith.constant 0 : i32
    %c0_i32_0 = arith.constant 0 : i32
    return %arg0, %c0_i32, %arg1 : i32, i32, i32
  }
  func.func @transform_1(%arg0: i32, %arg1: i32) -> (i32, i32, i32) {
    %c0_i32 = arith.constant 0 : i32
    %c0_i32_0 = arith.constant 0 : i32
    %c0_i32_1 = arith.constant 0 : i32
    return %arg0, %c0_i32, %c0_i32_0 : i32, i32, i32
  }
  func.func @transform_2(%arg0: i32, %arg1: i32) -> (i32, i32, i32) {
    %c0_i32 = arith.constant 0 : i32
    %c0_i32_0 = arith.constant 0 : i32
    %c0_i32_1 = arith.constant 0 : i32
    return %arg0, %c0_i32, %c0_i32_0 : i32, i32, i32
  }
  func.func @transform_3(%arg0: i32, %arg1: i32) -> (i32, i32, i32) {
    %c0_i32 = arith.constant 0 : i32
    %c0_i32_0 = arith.constant 0 : i32
    return %arg0, %c0_i32, %arg1 : i32, i32, i32
  }
}

</mosaic_0001>

<llo_original>
// kernel: conv_block_forward.3
$region0: #{conv_block_forward.3}
  #allocation0 [shape = 'u32[]', space=smem, size = 0x4, offset = 0x4, fixed_abs, tag = 'smem constant byte address 0x4 - core index']
  #allocation1 [shape = 'u32[144,128]{1,0:T(1,128)}', space=vmem, size = 0x12000, scoped, tag = 'internal scratch']
  %s0 = inlined_call_operand.vmem [shape: f32[2,8,256], index: 0, kind: input, shape index: {}, may-alias: {0,3}]
  %s1 = inlined_call_operand.vmem [shape: f32[2,8,1], index: 1, kind: input, shape index: {}]
  %s2 = inlined_call_operand.vmem [shape: f32[2,8,1], index: 2, kind: input, shape index: {}]
  %s3 = inlined_call_operand.vmem [shape: f32[2,8,256], index: 3, kind: output, shape index: {}, may-alias: {0,3}]
  %s4 = sld [smem:[#allocation0]]
  $region45: #{conv_block_forward.3} parent=0
    _
  %s6 = ssub.s32 1, %s4
  %s7 = scalar_select 0, %s6, %s4
  loop: start=0, step=1, limit=4
  $region2: #{conv_block_forward.3} parent=0 // loop_pre_header
    _
  $region3: #{conv_block_forward.3} parent=0 // loop_header
    %s9 = sphi 0, %s13
    %p10 = scmp.ge.s32.totalorder %s9, 4
    %s16 = sphi 0, %s28
    %s17 = sphi 0, %s24
    %s18 = sphi 0, %s16
    %s19 = sphi 0, %s17
    %s20 = sphi 0, %s18
    %s21 = sphi 0, %s19
    %s33 = sphi 0, %s35
    %s36 = sphi 0, %s33
    %s37 = sphi 0, %s36
    %s53 = sphi 0, %s37
    %s59 = sphi 0, %s61
    %s62 = sphi 0, %s59
    %s63 = sphi 0, %s62
    %s79 = sphi 0, %s63
    %s85 = sphi 0, %s87
    %s88 = sphi 0, %s85
    %s89 = sphi 0, %s88
    %s105 = sphi 0, %s89
    %s113 = sphi 0, %s115
    %s116 = sphi 0, %s113
    %s117 = sphi 0, %s116
    %s133 = sphi 0, %s117
  $region4: #{conv_block_forward.3} parent=0 // loop_header_branch
    %12 = sbr.rel (%p10) target = $region8
  $region5: #{conv_block_forward.3} parent=0 // loop_body
    %s14 = ssub.s32 %s9, 1
    %s15 = ssub.s32 %s9, 2
    %s22 = sadd.s32 1, %s17
    %p23 = scmp.ge.s32.totalorder %s22, 1
    %s24 = scalar_select %p23, 0, %s22
    %s25 = sadd.s32 1, %s16
    %s26 = scalar_select %p23, %s25, %s16
    %p27 = scmp.ge.s32.totalorder %s26, 2
    %s28 = scalar_select %p27, 0, %s26
    %s29 = ssub.s32 %s16, %s28
    %s30 = ssub.s32 %s17, %s24
    %s31 = sor.u32 %s29, %s30
    %p32 = scmp.eq.s32.totalorder %s31, 0
    %s34 = sadd.s32 %s33, 1
    %s35 = scalar_select %p32, %s33, %s34
    %p38 = pneg %p32
    %p39 = scmp.eq.s32.totalorder %s9, 1
    %p40 = por %p38, %p39
    %p41 = scmp.ne.s32.totalorder %s33, %s36
    %p42 = scmp.eq.s32.totalorder %s9, 0
    %p43 = por %p41, %p42
    %p44 = scmp.ne.s32.totalorder %s33, %s36
    %p45 = scmp.eq.s32.totalorder %s14, 1
    %p46 = por %p44, %p45
    %p47 = scmp.ne.s32.totalorder %s36, %s37
    %p48 = scmp.eq.s32.totalorder %s14, 0
    %p49 = por %p47, %p48
    %p50 = scmp.ne.s32.totalorder %s36, %s37
    %p51 = scmp.eq.s32.totalorder %s15, 1
    %p52 = por %p50, %p51
    %p54 = scmp.ne.s32.totalorder %s37, %s53
    %p55 = scmp.eq.s32.totalorder %s15, 0
    %p56 = por %p54, %p55
    %s57 = ssub.s32 %s16, %s28
    %p58 = scmp.eq.s32.totalorder %s57, 0
    %s60 = sadd.s32 %s59, 1
    %s61 = scalar_select %p58, %s59, %s60
    %p64 = pneg %p58
    %p65 = scmp.eq.s32.totalorder %s9, 1
    %p66 = por %p64, %p65
    %p67 = scmp.ne.s32.totalorder %s59, %s62
    %p68 = scmp.eq.s32.totalorder %s9, 0
    %p69 = por %p67, %p68
    %p70 = scmp.ne.s32.totalorder %s59, %s62
    %p71 = scmp.eq.s32.totalorder %s14, 1
    %p72 = por %p70, %p71
    %p73 = scmp.ne.s32.totalorder %s62, %s63
    %p74 = scmp.eq.s32.totalorder %s14, 0
    %p75 = por %p73, %p74
    %p76 = scmp.ne.s32.totalorder %s62, %s63
    %p77 = scmp.eq.s32.totalorder %s15, 1
    %p78 = por %p76, %p77
    %p80 = scmp.ne.s32.totalorder %s63, %s79
    %p81 = scmp.eq.s32.totalorder %s15, 0
    %p82 = por %p80, %p81
    %s83 = ssub.s32 %s16, %s28
    %p84 = scmp.eq.s32.totalorder %s83, 0
    %s86 = sadd.s32 %s85, 1
    %s87 = scalar_select %p84, %s85, %s86
    %p90 = pneg %p84
    %p91 = scmp.eq.s32.totalorder %s9, 1
    %p92 = por %p90, %p91
    %p93 = scmp.ne.s32.totalorder %s85, %s88
    %p94 = scmp.eq.s32.totalorder %s9, 0
    %p95 = por %p93, %p94
    %p96 = scmp.ne.s32.totalorder %s85, %s88
    %p97 = scmp.eq.s32.totalorder %s14, 1
    %p98 = por %p96, %p97
    %p99 = scmp.ne.s32.totalorder %s88, %s89
    %p100 = scmp.eq.s32.totalorder %s14, 0
    %p101 = por %p99, %p100
    %p102 = scmp.ne.s32.totalorder %s88, %s89
    %p103 = scmp.eq.s32.totalorder %s15, 1
    %p104 = por %p102, %p103
    %p106 = scmp.ne.s32.totalorder %s89, %s105
    %p107 = scmp.eq.s32.totalorder %s15, 0
    %p108 = por %p106, %p107
    %s109 = ssub.s32 %s16, %s28
    %s110 = ssub.s32 %s17, %s24
    %s111 = sor.u32 %s109, %s110
    %p112 = scmp.eq.s32.totalorder %s111, 0
    %s114 = sadd.s32 %s113, 1
    %s115 = scalar_select %p112, %s113, %s114
    %p118 = pneg %p112
    %p119 = scmp.eq.s32.totalorder %s9, 1
    %p120 = por %p118, %p119
    %p121 = scmp.ne.s32.totalorder %s113, %s116
    %p122 = scmp.eq.s32.totalorder %s9, 0
    %p123 = por %p121, %p122
    %p124 = scmp.ne.s32.totalorder %s113, %s116
    %p125 = scmp.eq.s32.totalorder %s14, 1
    %p126 = por %p124, %p125
    %p127 = scmp.ne.s32.totalorder %s116, %s117
    %p128 = scmp.eq.s32.totalorder %s14, 0
    %p129 = por %p127, %p128
    %p130 = scmp.ne.s32.totalorder %s116, %s117
    %p131 = scmp.eq.s32.totalorder %s15, 1
    %p132 = por %p130, %p131
    %p134 = scmp.ne.s32.totalorder %s117, %s133
    %p135 = scmp.eq.s32.totalorder %s15, 0
    %p136 = por %p134, %p135
    %p137 = scmp.le.s32.totalorder 1, %s9
    %p138 = scmp.lt.s32.totalorder %s9, 3
    %p139 = pnand %p137, %p138
    %p140 = pneg %p139
    // Predicated region
    $region9: #{conv_block_forward.3} parent=5 // pred_check
      _
    $region10: #{conv_block_forward.3} parent=5 // pred_check_branch
      %142 = sbr.rel (%p139) target = $region12
    $region11: #{conv_block_forward.3} parent=5 // pred_region
      %s143 = ssub.s32 %s9, 1
    $region12: #{conv_block_forward.3} parent=5 // pred_fallthru
      _
    %p144 = scmp.lt.s32.totalorder %s9, 2
    // Predicated region
    $region13: #{conv_block_forward.3} parent=5 // pred_check
      %p145 = pneg %p144
    $region14: #{conv_block_forward.3} parent=5 // pred_check_branch
      %147 = sbr.rel (%p145) target = $region16
    $region15: #{conv_block_forward.3} parent=5 // pred_region
      // Predicated region
      $region17: #{conv_block_forward.3} parent=15 // pred_check
        %p148 = pneg %p43
      $region18: #{conv_block_forward.3} parent=15 // pred_check_branch
        %150 = sbr.rel (%p148) target = $region20
      $region19: #{conv_block_forward.3} parent=15 // pred_region
        %s151 = smul.u32 2, %s17
        %p152 = scmp.lt.s32.totalorder %s16, 1
        %s153 = scalar_select %p152, %s16, 1
        %p154 = scmp.lt.s32.totalorder %s151, 1
        %s155 = scalar_select %p154, %s151, 1
        %s156 = smul.addr %s153, 2
        %s157 = sadd.s32 %s155, %s156
        %s158 = smul.addr %s157, 8
        %s159 = scalar_lea.vmem %s0, %s158
        %s160 = smul.u32 2, %s17
      $region20: #{conv_block_forward.3} parent=15 // pred_fallthru
        _
      // Predicated region
      $region21: #{conv_block_forward.3} parent=15 // pred_check
        %p161 = pneg %p69
      $region22: #{conv_block_forward.3} parent=15 // pred_check_branch
        %163 = sbr.rel (%p161) target = $region24
      $region23: #{conv_block_forward.3} parent=15 // pred_region
        %p164 = scmp.lt.s32.totalorder %s16, 1
        %s165 = scalar_select %p164, %s16, 1
        %s166 = smul.addr %s165, 8
        %s167 = scalar_lea.vmem %s1, %s166
      $region24: #{conv_block_forward.3} parent=15 // pred_fallthru
        _
      // Predicated region
      $region25: #{conv_block_forward.3} parent=15 // pred_check
        %p168 = pneg %p95
      $region26: #{conv_block_forward.3} parent=15 // pred_check_branch
        %170 = sbr.rel (%p168) target = $region28
      $region27: #{conv_block_forward.3} parent=15 // pred_region
        %p171 = scmp.lt.s32.totalorder %s16, 1
        %s172 = scalar_select %p171, %s16, 1
        %s173 = smul.addr %s172, 8
        %s174 = scalar_lea.vmem %s2, %s173
      $region28: #{conv_block_forward.3} parent=15 // pred_fallthru
        _
    $region16: #{conv_block_forward.3} parent=5 // pred_fallthru
      _
    %p175 = scmp.le.s32.totalorder 1, %s9
    %p176 = scmp.lt.s32.totalorder %s9, 3
    %p177 = pnand %p175, %p176
    %p178 = pneg %p177
    // Predicated region
    $region29: #{conv_block_forward.3} parent=5 // pred_check
      _
    $region30: #{conv_block_forward.3} parent=5 // pred_check_branch
      %180 = sbr.rel (%p177) target = $region32
    $region31: #{conv_block_forward.3} parent=5 // pred_region
      %s181 = ssub.s32 %s9, 1
      %s182 = smul.u32 2, %s19
      %p183 = scmp.lt.s32.totalorder %s18, 1
      %s184 = scalar_select %p183, %s18, 1
      %p185 = scmp.lt.s32.totalorder %s182, 1
      %s186 = scalar_select %p185, %s182, 1
      %s187 = smul.addr %s184, 2
      %s188 = sadd.s32 %s186, %s187
      %s189 = smul.addr %s188, 8
      %s190 = scalar_lea.vmem %s0, %s189
      %p191 = pneg %p49
      %p192 = pneg %p46
      %p193 = scmp.lt.s32.totalorder %s18, 1
      %s194 = scalar_select %p193, %s18, 1
      %s195 = smul.addr %s194, 8
      %s196 = scalar_lea.vmem %s1, %s195
      %p197 = pneg %p75
      %p198 = pneg %p72
      %p199 = scmp.lt.s32.totalorder %s18, 1
      %s200 = scalar_select %p199, %s18, 1
      %s201 = smul.addr %s200, 8
      %s202 = scalar_lea.vmem %s2, %s201
      %p203 = pneg %p101
      %p204 = pneg %p98
      %p205 = pneg %p129
      %p206 = pneg %p126
      %s207 = smul.u32 2, %s19
      %p208 = scmp.lt.s32.totalorder %s18, 1
      %s209 = scalar_select %p208, %s18, 1
      %p210 = scmp.lt.s32.totalorder %s207, 1
      %s211 = scalar_select %p210, %s207, 1
      %s212 = smul.addr %s209, 2
      %s213 = sadd.s32 %s211, %s212
      %s214 = smul.addr %s213, 8
      %s215 = scalar_lea.vmem %s3, %s214
      %s216 = smul.u32 2, %s19
      %p217 = scmp.lt.s32.totalorder %s18, 1
      %s218 = scalar_select %p217, %s18, 1
      %p219 = scmp.lt.s32.totalorder %s216, 1
      %s220 = scalar_select %p219, %s216, 1
      %s221 = smul.addr %s218, 2
      %s222 = sadd.s32 %s220, %s221
      %s223 = smul.addr %s222, 8
      %s224 = scalar_lea.vmem %s0, %s223
      %s225 = smul.u32 2, %s19
      %p226 = scmp.lt.s32.totalorder %s18, 1
      %s227 = scalar_select %p226, %s18, 1
      %s228 = smul.addr %s227, 8
      %s229 = scalar_lea.vmem %s1, %s228
      %p230 = scmp.lt.s32.totalorder %s18, 1
      %s231 = scalar_select %p230, %s18, 1
      %s232 = smul.addr %s231, 8
      %s233 = scalar_lea.vmem %s2, %s232
      %s234 = smul.u32 2, %s19
      %p235 = scmp.lt.s32.totalorder %s18, 1
      %s236 = scalar_select %p235, %s18, 1
      %p237 = scmp.lt.s32.totalorder %s234, 1
      %s238 = scalar_select %p237, %s234, 1
      %s239 = smul.addr %s236, 2
      %s240 = sadd.s32 %s238, %s239
      %s241 = smul.addr %s240, 8
      %s242 = scalar_lea.vmem %s3, %s241
      %s243 = smul.u32 2, %s19
      %v244 = vld [vmem:[%s224] sm:$0xff]
      %v245 = vld [vmem:[%s224 + $0x8] sm:$0xff]
      %v246 = vld [vmem:[%s229] sm:$0xff]
      %248 = vset.pattern.permute.xlu0 0
      %249 = vperm.xlu0 %248, %v246
      %v250 = vpop.permute.xlu0 %249
      %v252 = vmul.f32 %v244, %v250
      %v253 = vmul.f32 %v245, %v250
      %v254 = vld [vmem:[%s233] sm:$0xff]
      %256 = vset.pattern.permute.xlu0 0
      %257 = vperm.xlu0 %256, %v254
      %v258 = vpop.permute.xlu0 %257
      %v260 = vadd.f32 %v252, %v258
      %v261 = vadd.f32 %v253, %v258
      %262 = vst [vmem:[%s242] sm:$0xff] %v260
      %263 = vst [vmem:[%s242 + $0x8] sm:$0xff] %v261
      %s264 = smul.u32 2, %s19
      %p265 = scmp.lt.s32.totalorder %s18, 1
      %s266 = scalar_select %p265, %s18, 1
      %p267 = scmp.lt.s32.totalorder %s264, 1
      %s268 = scalar_select %p267, %s264, 1
      %s269 = smul.addr %s266, 2
      %s270 = sadd.s32 %s268, %s269
      %s271 = smul.addr %s270, 8
      %s272 = scalar_lea.vmem %s3, %s271
      // Predicated region
      $region33: #{conv_block_forward.3} parent=31 // pred_check
        %p273 = pneg %p126
      $region34: #{conv_block_forward.3} parent=31 // pred_check_branch
        %275 = sbr.rel (%p273) target = $region36
      $region35: #{conv_block_forward.3} parent=31 // pred_region
        %s276 = smul.u32 2, %s19
      $region36: #{conv_block_forward.3} parent=31 // pred_fallthru
        _
    $region32: #{conv_block_forward.3} parent=5 // pred_fallthru
      _
    %p277 = scmp.le.s32.totalorder 2, %s9
    // Predicated region
    $region37: #{conv_block_forward.3} parent=5 // pred_check
      %p278 = pneg %p277
    $region38: #{conv_block_forward.3} parent=5 // pred_check_branch
      %280 = sbr.rel (%p278) target = $region40
    $region39: #{conv_block_forward.3} parent=5 // pred_region
      %s281 = ssub.s32 %s9, 2
      // Predicated region
      $region41: #{conv_block_forward.3} parent=39 // pred_check
        %p282 = pneg %p132
      $region42: #{conv_block_forward.3} parent=39 // pred_check_branch
        %284 = sbr.rel (%p282) target = $region44
      $region43: #{conv_block_forward.3} parent=39 // pred_region
        %s285 = smul.u32 2, %s21
        %p286 = scmp.lt.s32.totalorder %s20, 1
        %s287 = scalar_select %p286, %s20, 1
        %p288 = scmp.lt.s32.totalorder %s285, 1
        %s289 = scalar_select %p288, %s285, 1
        %s290 = smul.addr %s287, 2
        %s291 = sadd.s32 %s289, %s290
        %s292 = smul.addr %s291, 8
        %s293 = scalar_lea.vmem %s3, %s292
      $region44: #{conv_block_forward.3} parent=39 // pred_fallthru
        _
    $region40: #{conv_block_forward.3} parent=5 // pred_fallthru
      _
  $region6: #{conv_block_forward.3} parent=0 // loop_footer
    %s13 = sadd.s32 1, %s9
  $region7: #{conv_block_forward.3} parent=0 // loop_footer_branch
    %8 = sbr.rel target = $region3
  $region8: #{conv_block_forward.3} parent=0 // loop_exit
    _

// kernel: conv_block_forward.2
$region0: #{conv_block_forward.2}
  #allocation0 [shape = 'u32[]', space=smem, size = 0x4, offset = 0x4, fixed_abs, tag = 'smem constant byte address 0x4 - core index']
  #allocation1 [shape = 'u32[144,128]{1,0:T(1,128)}', space=vmem, size = 0x12000, scoped, tag = 'internal scratch']
  %s0 = inlined_call_operand.vmem [shape: bf16[2,36,256], index: 0, kind: input, shape index: {}]
  %s1 = inlined_call_operand.vmem [shape: bf16[8,36], index: 1, kind: input, shape index: {}]
  %s2 = inlined_call_operand.vmem [shape: f32[8,1], index: 2, kind: input, shape index: {}]
  %s3 = inlined_call_operand.vmem [shape: f32[2,8,256], index: 3, kind: output, shape index: {0}]
  %s4 = inlined_call_operand.vmem [shape: f32[2,1,8,1], index: 4, kind: output, shape index: {1}]
  %s5 = inlined_call_operand.vmem [shape: f32[2,1,8,1], index: 5, kind: output, shape index: {2}]
  %6 = xla_tuple %s3, %s4, %s5
  %s7 = sld [smem:[#allocation0]]
  $region61: #{conv_block_forward.2} parent=0
    _
  %s9 = ssub.s32 1, %s7
  %s10 = scalar_select 0, %s9, %s7
  loop: start=0, step=1, limit=4
  $region2: #{conv_block_forward.2} parent=0 // loop_pre_header
    _
  $region3: #{conv_block_forward.2} parent=0 // loop_header
    %s12 = sphi 0, %s16
    %p13 = scmp.ge.s32.totalorder %s12, 4
    %s19 = sphi 0, %s31
    %s20 = sphi 0, %s27
    %s21 = sphi 0, %s19
    %s22 = sphi 0, %s20
    %s23 = sphi 0, %s21
    %s24 = sphi 0, %s22
    %s36 = sphi 0, %s38
    %s39 = sphi 0, %s36
    %s40 = sphi 0, %s39
    %s56 = sphi 0, %s40
    %s60 = sphi 0, %s60
    %s62 = sphi 0, %s60
    %s63 = sphi 0, %s62
    %s77 = sphi 0, %s63
    %s81 = sphi 0, %s81
    %s83 = sphi 0, %s81
    %s84 = sphi 0, %s83
    %s98 = sphi 0, %s84
    %s106 = sphi 0, %s108
    %s109 = sphi 0, %s106
    %s110 = sphi 0, %s109
    %s126 = sphi 0, %s110
    %s134 = sphi 0, %s136
    %s137 = sphi 0, %s134
    %s138 = sphi 0, %s137
    %s154 = sphi 0, %s138
    %s162 = sphi 0, %s164
    %s165 = sphi 0, %s162
    %s166 = sphi 0, %s165
    %s182 = sphi 0, %s166
  $region4: #{conv_block_forward.2} parent=0 // loop_header_branch
    %15 = sbr.rel (%p13) target = $region8
  $region5: #{conv_block_forward.2} parent=0 // loop_body
    %s17 = ssub.s32 %s12, 1
    %s18 = ssub.s32 %s12, 2
    %s25 = sadd.s32 1, %s20
    %p26 = scmp.ge.s32.totalorder %s25, 1
    %s27 = scalar_select %p26, 0, %s25
    %s28 = sadd.s32 1, %s19
    %s29 = scalar_select %p26, %s28, %s19
    %p30 = scmp.ge.s32.totalorder %s29, 2
    %s31 = scalar_select %p30, 0, %s29
    %s32 = ssub.s32 %s19, %s31
    %s33 = ssub.s32 %s20, %s27
    %s34 = sor.u32 %s32, %s33
    %p35 = scmp.eq.s32.totalorder %s34, 0
    %s37 = sadd.s32 %s36, 1
    %s38 = scalar_select %p35, %s36, %s37
    %p41 = pneg %p35
    %p42 = scmp.eq.s32.totalorder %s12, 1
    %p43 = por %p41, %p42
    %p44 = scmp.ne.s32.totalorder %s36, %s39
    %p45 = scmp.eq.s32.totalorder %s12, 0
    %p46 = por %p44, %p45
    %p47 = scmp.ne.s32.totalorder %s36, %s39
    %p48 = scmp.eq.s32.totalorder %s17, 1
    %p49 = por %p47, %p48
    %p50 = scmp.ne.s32.totalorder %s39, %s40
    %p51 = scmp.eq.s32.totalorder %s17, 0
    %p52 = por %p50, %p51
    %p53 = scmp.ne.s32.totalorder %s39, %s40
    %p54 = scmp.eq.s32.totalorder %s18, 1
    %p55 = por %p53, %p54
    %p57 = scmp.ne.s32.totalorder %s40, %s56
    %p58 = scmp.eq.s32.totalorder %s18, 0
    %p59 = por %p57, %p58
    %s61 = sadd.s32 %s60, 1
    %p64 = scmp.eq.s32.totalorder %s12, 1
    %p65 = scmp.ne.s32.totalorder %s60, %s62
    %p66 = scmp.eq.s32.totalorder %s12, 0
    %p67 = por %p65, %p66
    %p68 = scmp.ne.s32.totalorder %s60, %s62
    %p69 = scmp.eq.s32.totalorder %s17, 1
    %p70 = por %p68, %p69
    %p71 = scmp.ne.s32.totalorder %s62, %s63
    %p72 = scmp.eq.s32.totalorder %s17, 0
    %p73 = por %p71, %p72
    %p74 = scmp.ne.s32.totalorder %s62, %s63
    %p75 = scmp.eq.s32.totalorder %s18, 1
    %p76 = por %p74, %p75
    %p78 = scmp.ne.s32.totalorder %s63, %s77
    %p79 = scmp.eq.s32.totalorder %s18, 0
    %p80 = por %p78, %p79
    %s82 = sadd.s32 %s81, 1
    %p85 = scmp.eq.s32.totalorder %s12, 1
    %p86 = scmp.ne.s32.totalorder %s81, %s83
    %p87 = scmp.eq.s32.totalorder %s12, 0
    %p88 = por %p86, %p87
    %p89 = scmp.ne.s32.totalorder %s81, %s83
    %p90 = scmp.eq.s32.totalorder %s17, 1
    %p91 = por %p89, %p90
    %p92 = scmp.ne.s32.totalorder %s83, %s84
    %p93 = scmp.eq.s32.totalorder %s17, 0
    %p94 = por %p92, %p93
    %p95 = scmp.ne.s32.totalorder %s83, %s84
    %p96 = scmp.eq.s32.totalorder %s18, 1
    %p97 = por %p95, %p96
    %p99 = scmp.ne.s32.totalorder %s84, %s98
    %p100 = scmp.eq.s32.totalorder %s18, 0
    %p101 = por %p99, %p100
    %s102 = ssub.s32 %s19, %s31
    %s103 = ssub.s32 %s20, %s27
    %s104 = sor.u32 %s102, %s103
    %p105 = scmp.eq.s32.totalorder %s104, 0
    %s107 = sadd.s32 %s106, 1
    %s108 = scalar_select %p105, %s106, %s107
    %p111 = pneg %p105
    %p112 = scmp.eq.s32.totalorder %s12, 1
    %p113 = por %p111, %p112
    %p114 = scmp.ne.s32.totalorder %s106, %s109
    %p115 = scmp.eq.s32.totalorder %s12, 0
    %p116 = por %p114, %p115
    %p117 = scmp.ne.s32.totalorder %s106, %s109
    %p118 = scmp.eq.s32.totalorder %s17, 1
    %p119 = por %p117, %p118
    %p120 = scmp.ne.s32.totalorder %s109, %s110
    %p121 = scmp.eq.s32.totalorder %s17, 0
    %p122 = por %p120, %p121
    %p123 = scmp.ne.s32.totalorder %s109, %s110
    %p124 = scmp.eq.s32.totalorder %s18, 1
    %p125 = por %p123, %p124
    %p127 = scmp.ne.s32.totalorder %s110, %s126
    %p128 = scmp.eq.s32.totalorder %s18, 0
    %p129 = por %p127, %p128
    %s130 = ssub.s32 %s19, %s31
    %s131 = ssub.s32 %s20, %s27
    %s132 = sor.u32 %s130, %s131
    %p133 = scmp.eq.s32.totalorder %s132, 0
    %s135 = sadd.s32 %s134, 1
    %s136 = scalar_select %p133, %s134, %s135
    %p139 = pneg %p133
    %p140 = scmp.eq.s32.totalorder %s12, 1
    %p141 = por %p139, %p140
    %p142 = scmp.ne.s32.totalorder %s134, %s137
    %p143 = scmp.eq.s32.totalorder %s12, 0
    %p144 = por %p142, %p143
    %p145 = scmp.ne.s32.totalorder %s134, %s137
    %p146 = scmp.eq.s32.totalorder %s17, 1
    %p147 = por %p145, %p146
    %p148 = scmp.ne.s32.totalorder %s137, %s138
    %p149 = scmp.eq.s32.totalorder %s17, 0
    %p150 = por %p148, %p149
    %p151 = scmp.ne.s32.totalorder %s137, %s138
    %p152 = scmp.eq.s32.totalorder %s18, 1
    %p153 = por %p151, %p152
    %p155 = scmp.ne.s32.totalorder %s138, %s154
    %p156 = scmp.eq.s32.totalorder %s18, 0
    %p157 = por %p155, %p156
    %s158 = ssub.s32 %s19, %s31
    %s159 = ssub.s32 %s20, %s27
    %s160 = sor.u32 %s158, %s159
    %p161 = scmp.eq.s32.totalorder %s160, 0
    %s163 = sadd.s32 %s162, 1
    %s164 = scalar_select %p161, %s162, %s163
    %p167 = pneg %p161
    %p168 = scmp.eq.s32.totalorder %s12, 1
    %p169 = por %p167, %p168
    %p170 = scmp.ne.s32.totalorder %s162, %s165
    %p171 = scmp.eq.s32.totalorder %s12, 0
    %p172 = por %p170, %p171
    %p173 = scmp.ne.s32.totalorder %s162, %s165
    %p174 = scmp.eq.s32.totalorder %s17, 1
    %p175 = por %p173, %p174
    %p176 = scmp.ne.s32.totalorder %s165, %s166
    %p177 = scmp.eq.s32.totalorder %s17, 0
    %p178 = por %p176, %p177
    %p179 = scmp.ne.s32.totalorder %s165, %s166
    %p180 = scmp.eq.s32.totalorder %s18, 1
    %p181 = por %p179, %p180
    %p183 = scmp.ne.s32.totalorder %s166, %s182
    %p184 = scmp.eq.s32.totalorder %s18, 0
    %p185 = por %p183, %p184
    %p186 = scmp.le.s32.totalorder 1, %s12
    %p187 = scmp.lt.s32.totalorder %s12, 3
    %p188 = pnand %p186, %p187
    %p189 = pneg %p188
    // Predicated region
    $region9: #{conv_block_forward.2} parent=5 // pred_check
      _
    $region10: #{conv_block_forward.2} parent=5 // pred_check_branch
      %191 = sbr.rel (%p188) target = $region12
    $region11: #{conv_block_forward.2} parent=5 // pred_region
      %s192 = ssub.s32 %s12, 1
      // Predicated region
      $region13: #{conv_block_forward.2} parent=11 // pred_check
        %p193 = pneg %p73
      $region14: #{conv_block_forward.2} parent=11 // pred_check_branch
        %195 = sbr.rel (%p193) target = $region16
      $region15: #{conv_block_forward.2} parent=11 // pred_region
        _
      $region16: #{conv_block_forward.2} parent=11 // pred_fallthru
        _
      // Predicated region
      $region17: #{conv_block_forward.2} parent=11 // pred_check
        %p196 = pneg %p94
      $region18: #{conv_block_forward.2} parent=11 // pred_check_branch
        %198 = sbr.rel (%p196) target = $region20
      $region19: #{conv_block_forward.2} parent=11 // pred_region
        _
      $region20: #{conv_block_forward.2} parent=11 // pred_fallthru
        _
    $region12: #{conv_block_forward.2} parent=5 // pred_fallthru
      _
    %p199 = scmp.lt.s32.totalorder %s12, 2
    // Predicated region
    $region21: #{conv_block_forward.2} parent=5 // pred_check
      %p200 = pneg %p199
    $region22: #{conv_block_forward.2} parent=5 // pred_check_branch
      %202 = sbr.rel (%p200) target = $region24
    $region23: #{conv_block_forward.2} parent=5 // pred_region
      // Predicated region
      $region25: #{conv_block_forward.2} parent=23 // pred_check
        %p203 = pneg %p46
      $region26: #{conv_block_forward.2} parent=23 // pred_check_branch
        %205 = sbr.rel (%p203) target = $region28
      $region27: #{conv_block_forward.2} parent=23 // pred_region
        %s206 = smul.u32 2, %s20
        %p207 = scmp.lt.s32.totalorder %s19, 1
        %s208 = scalar_select %p207, %s19, 1
        %p209 = scmp.lt.s32.totalorder %s206, 1
        %s210 = scalar_select %p209, %s206, 1
        %s211 = smul.addr %s208, 10
        %s212 = sadd.s32 %s210, %s211
        %s213 = smul.addr %s212, 4
        %s214 = scalar_lea.vmem %s0, %s213
        %s215 = smul.u32 2, %s20
      $region28: #{conv_block_forward.2} parent=23 // pred_fallthru
        _
    $region24: #{conv_block_forward.2} parent=5 // pred_fallthru
      _
    %p216 = scmp.le.s32.totalorder 1, %s12
    %p217 = scmp.lt.s32.totalorder %s12, 3
    %p218 = pnand %p216, %p217
    %p219 = pneg %p218
    // Predicated region
    $region29: #{conv_block_forward.2} parent=5 // pred_check
      _
    $region30: #{conv_block_forward.2} parent=5 // pred_check_branch
      %221 = sbr.rel (%p218) target = $region32
    $region31: #{conv_block_forward.2} parent=5 // pred_region
      %s222 = ssub.s32 %s12, 1
      %s223 = smul.u32 2, %s22
      %p224 = scmp.lt.s32.totalorder %s21, 1
      %s225 = scalar_select %p224, %s21, 1
      %p226 = scmp.lt.s32.totalorder %s223, 1
      %s227 = scalar_select %p226, %s223, 1
      %s228 = smul.addr %s225, 10
      %s229 = sadd.s32 %s227, %s228
      %s230 = smul.addr %s229, 4
      %s231 = scalar_lea.vmem %s0, %s230
      %p232 = pneg %p52
      %p233 = pneg %p49
      %p234 = pneg %p73
      %p235 = pneg %p70
      %p236 = pneg %p94
      %p237 = pneg %p91
      %p238 = pneg %p122
      %p239 = pneg %p119
      %s240 = smul.u32 2, %s22
      %p241 = scmp.lt.s32.totalorder %s21, 1
      %s242 = scalar_select %p241, %s21, 1
      %p243 = scmp.lt.s32.totalorder %s240, 1
      %s244 = scalar_select %p243, %s240, 1
      %s245 = smul.addr %s242, 2
      %s246 = sadd.s32 %s244, %s245
      %s247 = smul.addr %s246, 8
      %s248 = scalar_lea.vmem %s3, %s247
      %p249 = pneg %p150
      %p250 = pneg %p147
      %p251 = scmp.lt.s32.totalorder %s21, 1
      %s252 = scalar_select %p251, %s21, 1
      %p253 = scmp.lt.s32.totalorder %s22, 0
      %s254 = scalar_select %p253, %s22, 0
      %s255 = sadd.s32 %s254, %s252
      %s256 = smul.addr %s255, 8
      %s257 = scalar_lea.vmem %s4, %s256
      %p258 = pneg %p178
      %p259 = pneg %p175
      %p260 = scmp.lt.s32.totalorder %s21, 1
      %s261 = scalar_select %p260, %s21, 1
      %p262 = scmp.lt.s32.totalorder %s22, 0
      %s263 = scalar_select %p262, %s22, 0
      %s264 = sadd.s32 %s263, %s261
      %s265 = smul.addr %s264, 8
      %s266 = scalar_lea.vmem %s5, %s265
      %s267 = smul.u32 2, %s22
      %p268 = scmp.lt.s32.totalorder %s21, 1
      %s269 = scalar_select %p268, %s21, 1
      %p270 = scmp.lt.s32.totalorder %s267, 1
      %s271 = scalar_select %p270, %s267, 1
      %s272 = smul.addr %s269, 10
      %s273 = sadd.s32 %s271, %s272
      %s274 = smul.addr %s273, 4
      %s275 = scalar_lea.vmem %s0, %s274
      %s276 = smul.u32 2, %s22
      %s277 = smul.u32 2, %s22
      %p278 = scmp.lt.s32.totalorder %s21, 1
      %s279 = scalar_select %p278, %s21, 1
      %p280 = scmp.lt.s32.totalorder %s277, 1
      %s281 = scalar_select %p280, %s277, 1
      %s282 = smul.addr %s279, 2
      %s283 = sadd.s32 %s281, %s282
      %s284 = smul.addr %s283, 8
      %s285 = scalar_lea.vmem %s3, %s284
      %s286 = smul.u32 2, %s22
      %p287 = scmp.lt.s32.totalorder %s21, 1
      %s288 = scalar_select %p287, %s21, 1
      %p289 = scmp.lt.s32.totalorder %s22, 0
      %s290 = scalar_select %p289, %s22, 0
      %s291 = sadd.s32 %s290, %s288
      %s292 = smul.addr %s291, 8
      %s293 = scalar_lea.vmem %s4, %s292
      %p294 = scmp.lt.s32.totalorder %s21, 1
      %s295 = scalar_select %p294, %s21, 1
      %p296 = scmp.lt.s32.totalorder %s22, 0
      %s297 = scalar_select %p296, %s22, 0
      %s298 = sadd.s32 %s297, %s295
      %s299 = smul.addr %s298, 8
      %s300 = scalar_lea.vmem %s5, %s299
      %v302 = vld [vmem:[%s1] sm:$0xf]
      %v303 = vld [vmem:[%s275] sm:$0xff]
      %v304 = vld [vmem:[%s275 + $0x8] sm:$0xff]
      %v305 = vld [vmem:[%s275 + $0x10] sm:$0xff]
      %v306 = vld [vmem:[%s275 + $0x18] sm:$0xff]
      %v307 = vld [vmem:[%s275 + $0x20] sm:$0x33]
      %v308 = vld [vmem:[%s2] sm:$0xff]
      %310 = vset.pattern.permute.xlu0 0
      %311 = vperm.xlu0 %310, %v308
      %v312 = vpop.permute.xlu0 %311
      %v319 = vunpack.c.l.b16 %v303
      %v320 = vunpack.c.h.b16 %v303
      %v321 = vunpack.c.l.b16 %v304
      %v322 = vunpack.c.h.b16 %v304
      %v323 = vunpack.c.l.b16 %v305
      %v324 = vunpack.c.h.b16 %v305
      %v325 = vunpack.c.l.b16 %v306
      %v326 = vunpack.c.h.b16 %v306
      %v327 = vunpack.c.l.b16 %v307
      %v328 = vunpack.c.h.b16 %v307
      %v329 = vpack.c.b16 %v321, %v319
      %v330 = vpack.c.b16 %v322, %v320
      %v331 = vpack.c.b16 %v325, %v323
      %v332 = vpack.c.b16 %v326, %v324
      %v333 = vpack.c.b16 %v327, %v327
      %v334 = vpack.c.b16 %v328, %v328
      %vm339 = vcmask 293888
      %v341 = vsel %vm339, %v302, 0
      %vm343 = vcmask 1041408
      %v345 = vsel %vm343, %v333, 0
      %v348 = vsel %vm343, %v334, 0
      %350 = vmatprep.subr.bf16.mxu0 0
      %351 = vmatpush1.bf16.msra.mxu0 0
      %352 = vmatprep.subr.bf16.mxu0 0
      %353 = vmatpush1.bf16.msra.mxu0 0
      %354 = vmatprep.subr.bf16.mxu0 0
      %355 = vmatpush1.bf16.msra.mxu0 0
      %356 = vmatprep.subr.bf16.mxu0 0
      %357 = vmatpush1.bf16.msra.mxu0 0
      %358 = vmatprep.subr.bf16.mxu0 0
      %359 = vmatpush1.bf16.msra.mxu0 0
      %360 = vmatprep.subr.bf16.mxu0 %v348
      %361 = vmatpush1.bf16.msra.mxu0 %v345
      %362 = vmatprep.subr.bf16.mxu0 %v332
      %363 = vmatpush1.bf16.msra.mxu0 %v331
      %364 = vmatprep.subr.bf16.mxu0 %v330
      %365 = vmatpush1.bf16.msra.mxu0 %v329
      %366 = vmatprep.subr.bf16.mxu0 0
      %367 = vmatpush2.bf16.msra.mxu0 0
      %368 = vmatprep.subr.bf16.mxu0 0
      %369 = vmatpush2.bf16.msra.mxu0 0
      %370 = vmatprep.subr.bf16.mxu0 0
      %371 = vmatpush2.bf16.msra.mxu0 0
      %372 = vmatprep.subr.bf16.mxu0 0
      %373 = vmatpush2.bf16.msra.mxu0 0
      %374 = vmatprep.subr.bf16.mxu0 0
      %375 = vmatpush2.bf16.msra.mxu0 0
      %376 = vmatprep.subr.bf16.mxu0 0
      %377 = vmatpush2.bf16.msra.mxu0 0
      %378 = vmatprep.subr.bf16.mxu0 0
      %379 = vmatpush2.bf16.msra.mxu0 0
      %380 = vmatprep.subr.bf16.mxu0 0
      %381 = vmatpush2.bf16.msra.mxu0 0
      %382 = vmatprep.mubr.bf16.mxu0 0
      %383 = vmatmul.mubr.bf16.gmra.mxu0 %v341
      %v384 = vpop.f32.mrf.mxu0
      %v385 = vadd.f32 %v312, %v384
      %v386 = vpop.f32.mrf.mxu0
      %v387 = vadd.f32 %v312, %v386
      %v388 = vpop.f32.mrf.mxu0
      %v389 = vpop.f32.mrf.mxu0
      %390 = vdwg.mxu0
      %vm391 = vcmp.ge.f32.partialorder %v385, 0.0
      %vm392 = vcmp.ge.f32.partialorder %v387, 0.0
      %v393 = vmul.f32 %v385, 0.01
      %v394 = vmul.f32 %v387, 0.01
      %v395 = vsel %vm391, %v385, %v393
      %v396 = vsel %vm392, %v387, %v394
      %397 = vst [vmem:[%s285] sm:$0xff] %v395
      %398 = vst [vmem:[%s285 + $0x8] sm:$0xff] %v396
      %v399 = vadd.f32 %v395, %v396
      %400 = vadd.xlane.f32.xlu0 %v399
      %v401 = vpop.xlane.xlu0 %400
      %vm402 = vcmask 7168
      %403 = vst.msk [vmem:[%s293] sm:$0xff] %vm402, %v401
      %v404 = vmul.f32 %v395, %v395
      %v405 = vmul.f32 %v396, %v396
      %v406 = vadd.f32 %v404, %v405
      %407 = vadd.xlane.f32.xlu0 %v406
      %v408 = vpop.xlane.xlu0 %407
      %409 = vst.msk [vmem:[%s300] sm:$0xff] %vm402, %v408
      %s410 = smul.u32 2, %s22
      %p411 = scmp.lt.s32.totalorder %s21, 1
      %s412 = scalar_select %p411, %s21, 1
      %p413 = scmp.lt.s32.totalorder %s410, 1
      %s414 = scalar_select %p413, %s410, 1
      %s415 = smul.addr %s412, 2
      %s416 = sadd.s32 %s414, %s415
      %s417 = smul.addr %s416, 8
      %s418 = scalar_lea.vmem %s3, %s417
      %p419 = scmp.lt.s32.totalorder %s21, 1
      %s420 = scalar_select %p419, %s21, 1
      %p421 = scmp.lt.s32.totalorder %s22, 0
      %s422 = scalar_select %p421, %s22, 0
      %s423 = sadd.s32 %s422, %s420
      %s424 = smul.addr %s423, 8
      %s425 = scalar_lea.vmem %s4, %s424
      %p426 = scmp.lt.s32.totalorder %s21, 1
      %s427 = scalar_select %p426, %s21, 1
      %p428 = scmp.lt.s32.totalorder %s22, 0
      %s429 = scalar_select %p428, %s22, 0
      %s430 = sadd.s32 %s429, %s427
      %s431 = smul.addr %s430, 8
      %s432 = scalar_lea.vmem %s5, %s431
      // Predicated region
      $region33: #{conv_block_forward.2} parent=31 // pred_check
        %p433 = pneg %p119
      $region34: #{conv_block_forward.2} parent=31 // pred_check_branch
        %435 = sbr.rel (%p433) target = $region36
      $region35: #{conv_block_forward.2} parent=31 // pred_region
        %s436 = smul.u32 2, %s22
      $region36: #{conv_block_forward.2} parent=31 // pred_fallthru
        _
      // Predicated region
      $region37: #{conv_block_forward.2} parent=31 // pred_check
        %p437 = pneg %p147
      $region38: #{conv_block_forward.2} parent=31 // pred_check_branch
        %439 = sbr.rel (%p437) target = $region40
      $region39: #{conv_block_forward.2} parent=31 // pred_region
        _
      $region40: #{conv_block_forward.2} parent=31 // pred_fallthru
        _
      // Predicated region
      $region41: #{conv_block_forward.2} parent=31 // pred_check
        %p440 = pneg %p175
      $region42: #{conv_block_forward.2} parent=31 // pred_check_branch
        %442 = sbr.rel (%p440) target = $region44
      $region43: #{conv_block_forward.2} parent=31 // pred_region
        _
      $region44: #{conv_block_forward.2} parent=31 // pred_fallthru
        _
    $region32: #{conv_block_forward.2} parent=5 // pred_fallthru
      _
    %p443 = scmp.le.s32.totalorder 2, %s12
    // Predicated region
    $region45: #{conv_block_forward.2} parent=5 // pred_check
      %p444 = pneg %p443
    $region46: #{conv_block_forward.2} parent=5 // pred_check_branch
      %446 = sbr.rel (%p444) target = $region48
    $region47: #{conv_block_forward.2} parent=5 // pred_region
      %s447 = ssub.s32 %s12, 2
      // Predicated region
      $region49: #{conv_block_forward.2} parent=47 // pred_check
        %p448 = pneg %p125
      $region50: #{conv_block_forward.2} parent=47 // pred_check_branch
        %450 = sbr.rel (%p448) target = $region52
      $region51: #{conv_block_forward.2} parent=47 // pred_region
        %s451 = smul.u32 2, %s24
        %p452 = scmp.lt.s32.totalorder %s23, 1
        %s453 = scalar_select %p452, %s23, 1
        %p454 = scmp.lt.s32.totalorder %s451, 1
        %s455 = scalar_select %p454, %s451, 1
        %s456 = smul.addr %s453, 2
        %s457 = sadd.s32 %s455, %s456
        %s458 = smul.addr %s457, 8
        %s459 = scalar_lea.vmem %s3, %s458
      $region52: #{conv_block_forward.2} parent=47 // pred_fallthru
        _
      // Predicated region
      $region53: #{conv_block_forward.2} parent=47 // pred_check
        %p460 = pneg %p153
      $region54: #{conv_block_forward.2} parent=47 // pred_check_branch
        %462 = sbr.rel (%p460) target = $region56
      $region55: #{conv_block_forward.2} parent=47 // pred_region
        %p463 = scmp.lt.s32.totalorder %s23, 1
        %s464 = scalar_select %p463, %s23, 1
        %p465 = scmp.lt.s32.totalorder %s24, 0
        %s466 = scalar_select %p465, %s24, 0
        %s467 = sadd.s32 %s466, %s464
        %s468 = smul.addr %s467, 8
        %s469 = scalar_lea.vmem %s4, %s468
      $region56: #{conv_block_forward.2} parent=47 // pred_fallthru
        _
      // Predicated region
      $region57: #{conv_block_forward.2} parent=47 // pred_check
        %p470 = pneg %p181
      $region58: #{conv_block_forward.2} parent=47 // pred_check_branch
        %472 = sbr.rel (%p470) target = $region60
      $region59: #{conv_block_forward.2} parent=47 // pred_region
        %p473 = scmp.lt.s32.totalorder %s23, 1
        %s474 = scalar_select %p473, %s23, 1
        %p475 = scmp.lt.s32.totalorder %s24, 0
        %s476 = scalar_select %p475, %s24, 0
        %s477 = sadd.s32 %s476, %s474
        %s478 = smul.addr %s477, 8
        %s479 = scalar_lea.vmem %s5, %s478
      $region60: #{conv_block_forward.2} parent=47 // pred_fallthru
        _
    $region48: #{conv_block_forward.2} parent=5 // pred_fallthru
      _
  $region6: #{conv_block_forward.2} parent=0 // loop_footer
    %s16 = sadd.s32 1, %s12
  $region7: #{conv_block_forward.2} parent=0 // loop_footer_branch
    %11 = sbr.rel target = $region3
  $region8: #{conv_block_forward.2} parent=0 // loop_exit
    _

</llo_original>
